<compile_context>
chip_gen: v6e
topology: v6e:2x2x1
jax: 0.10.0
libtpu: 0.0.40
codegen_flags: <defaults>
</compile_context>

<pallas_src>
import math

import jax
import jax.numpy as jnp
from jax.experimental import pallas as pl
from jax.experimental.pallas import tpu as pltpu


def _snake_kernel(x_ref, a_ref, inv_a_ref, o_ref):
    # x_ref: (TM, TN) tile of the repacked input.
    # a_ref, inv_a_ref: (1, TN) f32 parameter rows (broadcast over TM rows).
    x = x_ref[...].astype(jnp.float32)
    a = a_ref[...]
    inv_a = inv_a_ref[...]
    s = jnp.sin(x * a)
    o_ref[...] = (x + inv_a * (s * s)).astype(o_ref.dtype)


def snake(x, a, *, target_block_elems=512 * 1024):
    """Snake activation. x: (..., C), a: (C,). Returns same shape/dtype as x."""
    orig_shape = x.shape
    C = orig_shape[-1]
    assert a.shape == (C,), f"a must have shape ({C},), got {a.shape}"

    total = math.prod(orig_shape)
    if total == 0:
        return x

    # --- lane-dense repack: row width L is a multiple of C (so `a` tiles
    # periodically) and of 128 (so stores are unmasked, full-lane). ---
    L = C * 128 // math.gcd(C, 128)
    reps = L // C
    a32 = a.astype(jnp.float32)
    a_wide = jnp.tile(a32, reps).reshape(1, L)
    inv_a_wide = 1.0 / a_wide  # hoisted divide, exact f32 (no approx recip)

    # --- feature tile TN: a divisor of L, multiple of 128, <= 2048, so block
    # bytes stay bounded even for very large C. ---
    if L <= 2048:
        tn = L
    else:
        k = L // 128
        m = 1
        for cand in range(16, 0, -1):  # largest m <= 16 dividing k
            if k % cand == 0:
                m = cand
                break
        tn = 128 * m
    n_feat_blocks = L // tn

    # --- row tile TM: target ~target_block_elems per block, clamped to
    # [sub_mult, 1024], multiple of the sublane packing factor. ---
    itemsize = jnp.dtype(x.dtype).itemsize
    sub_mult = max(8, 32 // itemsize)  # 8 for f32, 16 for bf16, 32 for 8-bit

    R = -(-total // L)  # ceil-div: number of lane-dense rows
    tm = max(sub_mult, min(1024, target_block_elems // tn))
    tm = (tm // sub_mult) * sub_mult
    if R <= tm:
        tm = R                      # single full-extent row block (allowed)
        R_pad = R
    else:
        R_pad = -(-R // tm) * tm    # pad rows up to a multiple of TM

    padded_total = R_pad * L
    x_flat = x.reshape(total)
    if padded_total != total:
        x_flat = jnp.pad(x_flat, (0, padded_total - total))
    x2d = x_flat.reshape(R_pad, L)

    grid = (R_pad // tm, n_feat_blocks)

    out2d = pl.pallas_call(
        _snake_kernel,
        out_shape=jax.ShapeDtypeStruct((R_pad, L), x.dtype),
        grid_spec=pltpu.PrefetchScalarGridSpec(
            num_scalar_prefetch=0,
            grid=grid,
            in_specs=[
                pl.BlockSpec((tm, tn), lambda i, j: (i, j)),   # x tile
                pl.BlockSpec((1, tn), lambda i, j: (0, j)),    # a row
                pl.BlockSpec((1, tn), lambda i, j: (0, j)),    # 1/a row
            ],
            out_specs=pl.BlockSpec((tm, tn), lambda i, j: (i, j)),
        ),
        compiler_params=pltpu.CompilerParams(
            dimension_semantics=("parallel", "parallel"),
        ),
    )(x2d, a_wide, inv_a_wide)

    out_flat = out2d.reshape(padded_total)
    if padded_total != total:
        out_flat = out_flat[:total]
    return out_flat.reshape(orig_shape)


def snake_reference(x, a):
    # Pure-JAX reference matching the PyTorch forward exactly (f32 math).
    return x + (1.0 / a) * jnp.power(jnp.sin(x * a), 2)


if __name__ == "__main__":
    key = jax.random.PRNGKey(0)
    k_x, k_a, k_x2 = jax.random.split(key, 3)

    # --- small shape consistent with the module: (batch=2, seq=8, hidden=32) ---
    B, N, C = 2, 8, 32
    x = jax.random.normal(k_x, (B, N, C), dtype=jnp.float32)

    # Parameter init mirrors torch.distributions.Exponential(rate=0.1).rsample
    # (scale = 1/rate = 10), deterministic in-script.
    a = jax.random.exponential(k_a, (C,), dtype=jnp.float32) * 10.0

    out = snake(x, a)
    out = jax.block_until_ready(out)
    ref = snake_reference(x, a)
    assert out.shape == x.shape and out.dtype == x.dtype
    assert jnp.allclose(out, ref, atol=1e-5, rtol=1e-5), "mismatch vs reference"

    # --- second check exercising the padded / multi-block tiling path ---
    B2, N2, C2 = 2, 123, 96          # rows not divisible by the lane-dense width
    x2 = jax.random.normal(k_x2, (B2, N2, C2), dtype=jnp.float32)
    a2 = jax.random.exponential(k_a, (C2,), dtype=jnp.float32) * 10.0
    out2 = snake(x2, a2, target_block_elems=8 * 384)   # force small tiles
    out2 = jax.block_until_ready(out2)
    ref2 = snake_reference(x2, a2)
    assert out2.shape == x2.shape and out2.dtype == x2.dtype
    assert jnp.allclose(out2, ref2, atol=1e-5, rtol=1e-5), "mismatch (tiled path)"

    print("KERNEL_OK")
</pallas_src>

<mosaic_0001>
module attributes {stable_mosaic.version = 11 : i64} {
  func.func @_snake_kernel(%arg0: i32, %arg1: i32, %arg2: memref<4x128xf32, #tpu.memory_space<vmem>>, %arg3: memref<1x128xf32, #tpu.memory_space<vmem>>, %arg4: memref<1x128xf32, #tpu.memory_space<vmem>>, %arg5: memref<4x128xf32, #tpu.memory_space<vmem>>) attributes {dimension_semantics = [#tpu.dimension_semantics<parallel>, #tpu.dimension_semantics<parallel>], iteration_bounds = array<i64: 1, 1>, scalar_prefetch = 0 : i64, scratch_operands = 0 : i64, tpu.core_type = #tpu.core_type<tc>, window_params = [{transform_indices = @transform_0, window_bounds = array<i64: 4, 128>}, {transform_indices = @transform_1, window_bounds = array<i64: 1, 128>}, {transform_indices = @transform_2, window_bounds = array<i64: 1, 128>}, {transform_indices = @transform_3, window_bounds = array<i64: 4, 128>}]} {
    %c0 = arith.constant 0 : index
    %c0_0 = arith.constant 0 : index
    %0 = vector.load %arg2[%c0, %c0_0] : memref<4x128xf32, #tpu.memory_space<vmem>>, vector<4x128xf32>
    %c0_1 = arith.constant 0 : index
    %c0_2 = arith.constant 0 : index
    %1 = vector.load %arg3[%c0_1, %c0_2] : memref<1x128xf32, #tpu.memory_space<vmem>>, vector<1x128xf32>
    %c0_3 = arith.constant 0 : index
    %c0_4 = arith.constant 0 : index
    %2 = vector.load %arg4[%c0_3, %c0_4] : memref<1x128xf32, #tpu.memory_space<vmem>>, vector<1x128xf32>
    %3 = vector.broadcast %1 : vector<1x128xf32> to vector<4x128xf32>
    %4 = arith.mulf %0, %3 : vector<4x128xf32>
    %5 = math.sin %4 : vector<4x128xf32>
    %6 = arith.mulf %5, %5 : vector<4x128xf32>
    %7 = vector.broadcast %2 : vector<1x128xf32> to vector<4x128xf32>
    %8 = arith.mulf %7, %6 : vector<4x128xf32>
    %9 = arith.addf %0, %8 : vector<4x128xf32>
    %c0_5 = arith.constant 0 : index
    %c0_6 = arith.constant 0 : index
    %10 = vector.load %arg5[%c0_5, %c0_6] : memref<4x128xf32, #tpu.memory_space<vmem>>, vector<4x128xf32>
    tpu.vector_store %arg5[%c0_5, %c0_6], %9 {strides = array<i32>} : memref<4x128xf32, #tpu.memory_space<vmem>>, vector<4x128xf32>,
    return
  }
  func.func @transform_0(%arg0: i32, %arg1: i32) -> (i32, i32) {
    %c0_i32 = arith.constant 0 : i32
    return %arg0, %arg1 : i32, i32
  }
  func.func @transform_1(%arg0: i32, %arg1: i32) -> (i32, i32) {
    %c0_i32 = arith.constant 0 : i32
    %c0_i32_0 = arith.constant 0 : i32
    return %c0_i32, %arg1 : i32, i32
  }
  func.func @transform_2(%arg0: i32, %arg1: i32) -> (i32, i32) {
    %c0_i32 = arith.constant 0 : i32
    %c0_i32_0 = arith.constant 0 : i32
    return %c0_i32, %arg1 : i32, i32
  }
  func.func @transform_3(%arg0: i32, %arg1: i32) -> (i32, i32) {
    %c0_i32 = arith.constant 0 : i32
    return %arg0, %arg1 : i32, i32
  }
}

</mosaic_0001>

<llo_original>
// kernel: tpu_custom_call.1
$region0: #{tpu_custom_call.1}
  #allocation0 [shape = 'u32[]', space=smem, size = 0x4, offset = 0x4, fixed_abs, tag = 'smem constant byte address 0x4 - core index']
  #allocation1 [shape = 'u32[144,128]{1,0:T(1,128)}', space=vmem, size = 0x12000, scoped, tag = 'internal scratch']
  %s0 = inlined_call_operand.hbm [shape: f32[4,128], index: 0, kind: input, shape index: {}]
  %s1 = inlined_call_operand.vmem [shape: f32[1,128], index: 1, kind: input, shape index: {}]
  %s2 = inlined_call_operand.vmem [shape: f32[1,128], index: 2, kind: input, shape index: {}]
  %s3 = inlined_call_operand.hbm [shape: f32[4,128], index: 3, kind: output, shape index: {}]
  %s4 = sld [smem:[#allocation0]]
  $region26: #{tpu_custom_call.1} parent=0
    _
  %s6 = ssub.s32 1, %s4
  %s7 = scalar_select 0, %s6, %s4
  $region1: #{tpu_custom_call.1} parent=0
    #allocation2 [shape = 'u8[2048]{0}', space=vmem, size = 0x800, scoped, tag = 'input window, operand 0, single buffered']
    #allocation3 [shape = 's32[1]{0}', space=sflag, size = 0x4, scoped, tag = 'scoped memory for tpu_custom_call.1']
    #allocation4 [shape = 's32[1]{0}', space=sflag, size = 0x4, scoped, tag = 'scoped memory for tpu_custom_call.1']
    #allocation5 [shape = 'u8[2048]{0}', space=vmem, size = 0x800, scoped, tag = 'output window, operand 0, single buffered']
    %8 = vsyncpa [#allocation3], 0
    %9 = vsyncpa [#allocation4], 0
    // Predicated region
    $region2: #{tpu_custom_call.1} parent=1 // pred_check
      _
    $region3: #{tpu_custom_call.1} parent=1 // pred_check_branch
      %11 = sbr.rel (0) target = $region5
    $region4: #{tpu_custom_call.1} parent=1 // pred_region
      %s13 = ssub.s32 64, 64
      %14 = vsyncadd [#allocation3], %s13
      %s16 = sshll.u32 [#allocation2], 4
      %s17 = int_to_ptr.vmem [resolvable:$true] %s16
      %19 = dma.hbm_to_vmem [thread:$0]  %s0, 64, %s17, [#allocation3]
    $region5: #{tpu_custom_call.1} parent=1 // pred_fallthru
      _
    // Predicated region
    $region6: #{tpu_custom_call.1} parent=1 // pred_check
      _
    $region7: #{tpu_custom_call.1} parent=1 // pred_check_branch
      %21 = sbr.rel (0) target = $region9
    $region8: #{tpu_custom_call.1} parent=1 // pred_region
      _
    $region9: #{tpu_custom_call.1} parent=1 // pred_fallthru
      _
    // Predicated region
    $region10: #{tpu_custom_call.1} parent=1 // pred_check
      _
    $region11: #{tpu_custom_call.1} parent=1 // pred_check_branch
      %23 = sbr.rel (0) target = $region13
    $region12: #{tpu_custom_call.1} parent=1 // pred_region
      _
    $region13: #{tpu_custom_call.1} parent=1 // pred_fallthru
      _
    // Predicated region
    $region14: #{tpu_custom_call.1} parent=1 // pred_check
      _
    $region15: #{tpu_custom_call.1} parent=1 // pred_check_branch
      %25 = sbr.rel (0) target = $region17
    $region16: #{tpu_custom_call.1} parent=1 // pred_region
      %26 = dma.done [#allocation3], 64
    $region17: #{tpu_custom_call.1} parent=1 // pred_fallthru
      _
    %v27 = vld [vmem:[#allocation2] sm:$0xf]
    %v28 = vld [vmem:[%s1] sm:$0x1]
    %v29 = vld [vmem:[%s2] sm:$0x1]
    %v31 = vlaneseq
    %v32 = vshrl.u32 %v31, 7
    %v33 = vsub.s32 0, %v32
    %v34 = vrot.slane %v28, %v33
    %v36 = vmul.f32 %v27, %v34
    %v37 = vand.u32 2147483647, %v36
    %vm38 = vcmp.le.f32.partialorder %v37, 0.7853982
    %vm39 = vcmp.lt.s32.totalorder %v36, 0
    %v40 = vand.u32 %v36, 2139095040
    %v41 = vshrl.u32 %v40, 23
    %v42 = vsub.s32 %v41, 127
    %v43 = vand.u32 2147483647, %v36
    %v44 = vand.u32 %v43, 8388607
    %v45 = vor.u32 %v44, 8388608
    %v46 = vsub.s32 0, %v45
    %v47 = vadd.s32 %v42, 1
    %vm48 = vcmp.gt.s32.totalorder %v47, 0
    %v49 = vsel %vm48, %v47, 0
    %v50 = vshrl.u32 %v49, 5
    %v51 = vand.u32 %v49, 31
    %v52 = vsub.s32 32, %v51
    %v53 = vshrl.u32 683565275, %v52
    %v54 = vshll.u32 683565275, %v51
    %v55 = vshrl.u32 2475754826, %v52
    %v56 = vor.u32 %v54, %v55
    %v57 = vshll.u32 2475754826, %v51
    %v58 = vshrl.u32 2131351028, %v52
    %v59 = vor.u32 %v57, %v58
    %v60 = vshll.u32 2131351028, %v51
    %v61 = vshrl.u32 2102212464, %v52
    %v62 = vor.u32 %v60, %v61
    %v63 = vshll.u32 2102212464, %v51
    %v64 = vshrl.u32 920167782, %v52
    %v65 = vor.u32 %v63, %v64
    %v66 = vshll.u32 920167782, %v51
    %v67 = vshrl.u32 1326507024, %v52
    %v68 = vor.u32 %v66, %v67
    %vm69 = vcmp.lt.s32.totalorder %v50, 1
    %vm70 = vcmp.lt.s32.totalorder %v50, 2
    %vm71 = vcmp.lt.s32.totalorder %v50, 3
    %vm72 = vcmp.lt.s32.totalorder %v50, 4
    %v73 = vsel %vm69, %v53, %v56
    %v74 = vsel %vm72, %v62, 2102212464
    %v75 = vsel %vm71, %v59, %v74
    %v76 = vsel %vm70, %v73, %v75
    %v77 = vsel %vm69, %v56, %v59
    %v78 = vsel %vm72, %v65, 920167782
    %v79 = vsel %vm71, %v62, %v78
    %v80 = vsel %vm70, %v77, %v79
    %v81 = vsel %vm69, %v59, %v62
    %v82 = vsel %vm72, %v68, 1326507024
    %v83 = vsel %vm71, %v65, %v82
    %v84 = vsel %vm70, %v81, %v83
    %v85 = vshll.u32 %v45, 8
    %v86 = vmul.u32.u64.compose %v85, %v84
    %v87 = vextract.low.u32 %v86
    %v88 = vextract.high.u32 %v86
    %v89 = vmul.u32.u64.compose %v85, %v80
    %v90 = vextract.low.u32 %v89
    %v91 = vextract.high.u32 %v89
    %v92 = vmul.u32 %v85, %v76
    %v93 = vadd.s32 %v88, %v90
    %vm94 = vc.u32 %v88, %v90
    %v95 = vadd.s32 %v91, 1
    %v96 = vsel %vm94, %v95, %v91
    %v97 = vadd.s32 %v92, %v96
    %v98 = vadd.s32 %v97, 536870912
    %v99 = vshrl.u32 %v98, 30
    %v100 = vshll.u32 %v99, 30
    %v101 = vsub.s32 %v97, %v100
    %vm102 = vcmp.lt.s32.totalorder %v101, 0
    %v103 = vsub.s32 0, %v101
    %v104 = vsel %vm102, %v103, %v101
    %v105 = vclz %v104
    %v106 = vsub.s32 %v105, 2
    %vm107 = vcmp.gt.s32.totalorder 0, %v106
    %v108 = vsel %vm107, 0, %v106
    %v109 = vsub.s32 32, %v108
    %v110 = vshll.u32 %v101, %v108
    %v111 = vshrl.u32 %v93, %v109
    %v112 = vor.u32 %v110, %v111
    %v113 = vsub.s32 4294967266, %v108
    %v114 = vadd.s32 %v113, 127
    %v115 = vshll.u32 %v114, 23
    %v116 = vor.u32 4788187, %v115
    %v117 = vand.u32 2147483647, %v116
    %v119 = vcvt.s32.f32 %v112
    %v120 = vmul.f32 %v119, %v117
    %v121 = vxor.u32 %v120, 2147483648
    %v122 = vsel %vm39, %v121, %v120
    %v123 = vsub.s32 4, %v99
    %v124 = vsel %vm39, %v123, %v99
    %v125 = vsel %vm38, %v36, %v122
    %v126 = vsel %vm38, 0, %v124
    %v127 = vcosq.f32.pop %v125
    %v128 = vsinq.f32.pop %v125
    %vm129 = vweird.f32 %v36
    %v130 = vadd.s32 %v126, 3
    %v131 = vand.u32 %v130, 3
    %vm132 = vcmp.lt.s32.totalorder %v131, 2
    %vm133 = vcmp.eq.s32.totalorder %v131, 0
    %v134 = vxor.u32 %v128, 2147483648
    %v135 = vsel %vm133, %v127, %v134
    %vm136 = vcmp.eq.s32.totalorder %v131, 2
    %v137 = vxor.u32 %v127, 2147483648
    %v138 = vsel %vm136, %v137, %v128
    %v139 = vsel %vm132, %v135, %v138
    %v140 = vsel %vm129, nan, %v139
    %v141 = vmul.f32 %v140, %v140
    %v143 = vlaneseq
    %v144 = vshrl.u32 %v143, 7
    %v145 = vsub.s32 0, %v144
    %v146 = vrot.slane %v29, %v145
    %v148 = vmul.f32 %v146, %v141
    %v149 = vadd.f32 %v27, %v148
    %150 = vst [vmem:[#allocation5] sm:$0xf] %v149
    // Predicated region
    $region18: #{tpu_custom_call.1} parent=1 // pred_check
      _
    $region19: #{tpu_custom_call.1} parent=1 // pred_check_branch
      %152 = sbr.rel (0) target = $region21
    $region20: #{tpu_custom_call.1} parent=1 // pred_region
      %s154 = ssub.s32 64, 64
      %155 = vsyncadd [#allocation4], %s154
      %s157 = sshll.u32 [#allocation5], 4
      %s158 = int_to_ptr.vmem [resolvable:$true] %s157
      %160 = dma.vmem_to_hbm [thread:$0]  %s158, 64, %s3, [#allocation4]
    $region21: #{tpu_custom_call.1} parent=1 // pred_fallthru
      _
    // Predicated region
    $region22: #{tpu_custom_call.1} parent=1 // pred_check
      _
    $region23: #{tpu_custom_call.1} parent=1 // pred_check_branch
      %162 = sbr.rel (0) target = $region25
    $region24: #{tpu_custom_call.1} parent=1 // pred_region
      %163 = dma.done [#allocation4], 64
    $region25: #{tpu_custom_call.1} parent=1 // pred_fallthru
      _
    %164 = vsyncpa [#allocation3], 1
    %165 = vsyncpa [#allocation4], 1

</llo_original>
